<compile_context>
chip_gen: v7x
topology: tpu7x:2x2x1
jax: 0.10.0
libtpu: 0.0.40
codegen_flags: <defaults>
</compile_context>

<pallas_src>
import functools

import jax
import jax.numpy as jnp
from jax.experimental import pallas as pl
from jax.experimental.pallas import tpu as pltpu


def _mqa_kernel(x_ref, o_ref, *, a2):
    # x_ref / o_ref: (tile_rows, C) VMEM tiles. Compute in f32 (EUP rsqrt), cast back.
    x = x_ref[...].astype(jnp.float32)
    o_ref[...] = jax.lax.rsqrt(1.0 + a2 * (x * x)).astype(o_ref.dtype)


def _default_block_bytes():
    # ~4 MiB blocks on v6e/v7x, ~2 MiB on v5e (its HBM is slow enough that 2 MiB
    # already amortizes the per-grid-step overhead to <10%).
    try:
        kind = jax.devices()[0].device_kind.lower()
    except Exception:
        return 2 * 1024 * 1024
    if "v5e" in kind or "v5 lite" in kind or "v5litepod" in kind:
        return 2 * 1024 * 1024
    return 4 * 1024 * 1024


def _mqa_2d(x2d, a2, block_bytes):
    """Run the elementwise kernel over a lane-dense (rows, C) slab."""
    rows, C = x2d.shape
    dtype = x2d.dtype
    itemsize = jnp.dtype(dtype).itemsize
    n = rows * C

    # Native sublane multiple for this dtype's packed vreg tile (8 f32, 16 bf16, 32 i8).
    sub = max(8, 32 // itemsize)

    bytes_per_row = C * itemsize
    tile_rows = max(1, block_bytes // bytes_per_row)
    tile_rows = min(tile_rows, rows)

    # Keep the grid at >= MIN_STEPS steps where the row count allows it: with a
    # 1-step grid there is no software pipelining (in-DMA, compute, out-DMA
    # serialize) and v7x cannot shard the "parallel" axis across its 2 TCs.
    MIN_STEPS = 8
    if rows > sub:
        tile_rows = min(tile_rows, pl.cdiv(rows, MIN_STEPS))

    if tile_rows < rows:
        tile_rows = max(sub, (tile_rows // sub) * sub)
        tile_rows = min(tile_rows, rows)

    grid = (pl.cdiv(rows, tile_rows),)

    # Double-buffered input + output = 4 blocks; request headroom explicitly so the
    # scoped-VMEM default (16 MiB on v5e) can never be the limiter, while staying
    # far below v7x's 64 MiB physical VMEM.
    block_actual = tile_rows * C * itemsize
    vmem_limit = int(min(48 * 1024 * 1024, max(32 * 1024 * 1024, 6 * block_actual)))

    return pl.pallas_call(
        functools.partial(_mqa_kernel, a2=a2),
        out_shape=jax.ShapeDtypeStruct((rows, C), dtype),
        grid=grid,
        in_specs=[pl.BlockSpec((tile_rows, C), lambda i: (i, 0))],
        out_specs=pl.BlockSpec((tile_rows, C), lambda i: (i, 0)),
        compiler_params=pltpu.CompilerParams(
            dimension_semantics=("parallel",),
            vmem_limit_bytes=vmem_limit,
        ),
        cost_estimate=pl.CostEstimate(
            flops=3 * n,
            transcendentals=n,
            bytes_accessed=2 * n * itemsize,
        ),
    )(x2d)


def multi_quadratic_activation(x, a=1.0, target_block_bytes=None):
    """Elementwise 1 / sqrt(1 + (a*x)^2), computed in a Pallas TPU kernel."""
    orig_shape = x.shape
    orig_dtype = x.dtype

    # `a` is a static module hyperparameter (fixed at nn.Module __init__ time), so
    # it is closed over and a^2 constant-folds into the kernel.
    # TODO(synk): if `a` ever needs to be a traced runtime value, pass it as a
    # (1, 1) SMEM scalar operand instead of closing over a Python float.
    a2 = float(a) * float(a)

    if target_block_bytes is None:
        target_block_bytes = _default_block_bytes()

    flat = x.reshape(-1)
    n = flat.shape[0]
    if n == 0:
        return x

    # Widest lane-dense column count (multiple of 128) that divides n exactly, so
    # the reshape is a pure view: no pad / trailing-slice HBM copies.
    C = None
    for cand in (8192, 4096, 2048, 1024, 512, 256, 128):
        if n % cand == 0:
            C = cand
            break

    if C is not None:
        out2d = _mqa_2d(flat.reshape(n // C, C), a2, target_block_bytes)
        return out2d.reshape(orig_shape)

    # Ragged fallback (n not a multiple of 128): kernel over the C-aligned prefix,
    # plain-jnp for the short (< C elements) tail. Extra HBM traffic is confined
    # to the tail instead of full-array pad + slice passes.
    C = 1024
    n_main = (n // C) * C
    tail = flat[n_main:]
    tail_out = jax.lax.rsqrt(1.0 + a2 * (tail.astype(jnp.float32) ** 2)).astype(orig_dtype)
    if n_main == 0:
        return tail_out.reshape(orig_shape)
    main_out = _mqa_2d(
        flat[:n_main].reshape(n_main // C, C), a2, target_block_bytes
    ).reshape(-1)
    # TODO(synk): the concatenate rewrites the prefix once; a manual-DMA
    # (memory_space=pl.ANY) variant could avoid even that if this path ever matters.
    return jnp.concatenate([main_out, tail_out]).reshape(orig_shape)


if __name__ == "__main__":
    key = jax.random.PRNGKey(0)
    x = jax.random.normal(key, (2, 4, 16, 16), dtype=jnp.float32)
    a = 1.0

    y = multi_quadratic_activation(x, a=a)
    y = jax.block_until_ready(y)

    # Reference check (plain JAX)
    y_ref = 1.0 / jnp.sqrt(1.0 + (a * x) ** 2)
    assert y.shape == x.shape and y.dtype == x.dtype
    assert jnp.allclose(y, y_ref, atol=1e-5, rtol=1e-5)

    print("KERNEL_OK")
</pallas_src>

<mosaic_0001>
module attributes {stable_mosaic.version = 11 : i64} {
  func.func @_mqa_kernel(%arg0: i32, %arg1: memref<1x2048xf32, #tpu.memory_space<vmem>>, %arg2: memref<1x2048xf32, #tpu.memory_space<vmem>>) attributes {dimension_semantics = [#tpu.dimension_semantics<parallel>], iteration_bounds = array<i64: 1>, scalar_prefetch = 0 : i64, scratch_operands = 0 : i64, tpu.core_type = #tpu.core_type<tc>, window_params = [{transform_indices = @transform_0, window_bounds = array<i64: 1, 2048>}, {transform_indices = @transform_1, window_bounds = array<i64: 1, 2048>}]} {
    %c0 = arith.constant 0 : index
    %c0_0 = arith.constant 0 : index
    %0 = vector.load %arg1[%c0, %c0_0] : memref<1x2048xf32, #tpu.memory_space<vmem>>, vector<1x2048xf32>
    %1 = arith.mulf %0, %0 : vector<1x2048xf32>
    %cst = arith.constant 1.000000e+00 : f32
    %2 = vector.broadcast %cst : f32 to vector<1x2048xf32>
    %3 = arith.mulf %2, %1 : vector<1x2048xf32>
    %cst_1 = arith.constant 1.000000e+00 : f32
    %4 = vector.broadcast %cst_1 : f32 to vector<1x2048xf32>
    %5 = arith.addf %4, %3 : vector<1x2048xf32>
    %6 = math.rsqrt %5 : vector<1x2048xf32>
    %c0_2 = arith.constant 0 : index
    %c0_3 = arith.constant 0 : index
    %7 = vector.load %arg2[%c0_2, %c0_3] : memref<1x2048xf32, #tpu.memory_space<vmem>>, vector<1x2048xf32>
    tpu.vector_store %arg2[%c0_2, %c0_3], %6 {strides = array<i32>} : memref<1x2048xf32, #tpu.memory_space<vmem>>, vector<1x2048xf32>,
    return
  }
  func.func @transform_0(%arg0: i32) -> (i32, i32) {
    %c0_i32 = arith.constant 0 : i32
    %c0_i32_0 = arith.constant 0 : i32
    return %arg0, %c0_i32 : i32, i32
  }
  func.func @transform_1(%arg0: i32) -> (i32, i32) {
    %c0_i32 = arith.constant 0 : i32
    %c0_i32_0 = arith.constant 0 : i32
    return %arg0, %c0_i32 : i32, i32
  }
}

</mosaic_0001>

<llo_original>
// kernel: tpu_custom_call.1
$region0: #{tpu_custom_call.1}
  #allocation0 [shape = 'u32[]', space=smem, size = 0x4, offset = 0x4, fixed_abs, tag = 'smem constant byte address 0x4 - core index']
  #allocation1 [shape = 'u32[144,128]{1,0:T(1,128)}', space=vmem, size = 0x12000, scoped, tag = 'internal scratch']
  %s0 = inlined_call_operand.hbm [shape: f32[1,2048], index: 0, kind: input, shape index: {}]
  %s1 = inlined_call_operand.hbm [shape: f32[1,2048], index: 1, kind: output, shape index: {}]
  %s2 = sld [smem:[#allocation0]]
  $region18: #{tpu_custom_call.1} parent=0
    _
  %s4 = ssub.s32 1, %s2
  %s5 = scalar_select 0, %s4, %s2
  $region1: #{tpu_custom_call.1} parent=0
    #allocation2 [shape = 'u8[8192]{0}', space=vmem, size = 0x2000, scoped, tag = 'input window, operand 0, single buffered']
    #allocation3 [shape = 's32[1]{0}', space=sflag, size = 0x4, scoped, tag = 'scoped memory for tpu_custom_call.1']
    #allocation4 [shape = 's32[1]{0}', space=sflag, size = 0x4, scoped, tag = 'scoped memory for tpu_custom_call.1']
    #allocation5 [shape = 'u8[8192]{0}', space=vmem, size = 0x2000, scoped, tag = 'output window, operand 0, single buffered']
    %6 = vsyncpa [#allocation3], 0
    %7 = vsyncpa [#allocation4], 0
    // Predicated region
    $region2: #{tpu_custom_call.1} parent=1 // pred_check
      _
    $region3: #{tpu_custom_call.1} parent=1 // pred_check_branch
      %9 = sbr.rel (0) target = $region5
    $region4: #{tpu_custom_call.1} parent=1 // pred_region
      %s11 = ssub.s32 256, 256
      %12 = vsyncadd [#allocation3], %s11
      %s14 = sshll.u32 [#allocation2], 4
      %s15 = int_to_ptr.vmem [resolvable:$true] %s14
      %17 = dma.hbm_to_vmem [thread:$0]  %s0, 256, %s15, [#allocation3]
    $region5: #{tpu_custom_call.1} parent=1 // pred_fallthru
      _
    // Predicated region
    $region6: #{tpu_custom_call.1} parent=1 // pred_check
      _
    $region7: #{tpu_custom_call.1} parent=1 // pred_check_branch
      %19 = sbr.rel (0) target = $region9
    $region8: #{tpu_custom_call.1} parent=1 // pred_region
      %20 = dma.done [#allocation3], 256
    $region9: #{tpu_custom_call.1} parent=1 // pred_fallthru
      _
    %v21 = vld [vmem:[#allocation2] sm:$0xff]
    %v22 = vld [vmem:[#allocation2 + $0x8] sm:$0xff]
    %v23 = vmul.f32 %v21, %v21
    %v24 = vmul.f32 %v22, %v22
    %v25 = vadd.f32 %v23, 1.0
    %v26 = vadd.f32 %v24, 1.0
    %v27 = vrsqrt.pop %v25
    %v28 = vrsqrt.pop %v26
    %29 = vst [vmem:[#allocation5] sm:$0xff] %v27
    %30 = vst [vmem:[#allocation5 + $0x8] sm:$0xff] %v28
    // Predicated region
    $region10: #{tpu_custom_call.1} parent=1 // pred_check
      _
    $region11: #{tpu_custom_call.1} parent=1 // pred_check_branch
      %32 = sbr.rel (0) target = $region13
    $region12: #{tpu_custom_call.1} parent=1 // pred_region
      %s34 = ssub.s32 256, 256
      %35 = vsyncadd [#allocation4], %s34
      %s37 = sshll.u32 [#allocation5], 4
      %s38 = int_to_ptr.vmem [resolvable:$true] %s37
      %40 = dma.vmem_to_hbm [thread:$0]  %s38, 256, %s1, [#allocation4]
    $region13: #{tpu_custom_call.1} parent=1 // pred_fallthru
      _
    // Predicated region
    $region14: #{tpu_custom_call.1} parent=1 // pred_check
      _
    $region15: #{tpu_custom_call.1} parent=1 // pred_check_branch
      %42 = sbr.rel (0) target = $region17
    $region16: #{tpu_custom_call.1} parent=1 // pred_region
      %43 = dma.done [#allocation4], 256
    $region17: #{tpu_custom_call.1} parent=1 // pred_fallthru
      _
    %44 = vsyncpa [#allocation3], 1
    %45 = vsyncpa [#allocation4], 1

</llo_original>
